<compile_context>
chip_gen: v5e
topology: v5e:2x2
jax: 0.10.0
libtpu: 0.0.40
codegen_flags: <defaults>
</compile_context>

<pallas_src>
import functools
import struct

import jax
import jax.numpy as jnp
from jax.experimental import pallas as pl
from jax.experimental.pallas import tpu as pltpu

LANES = 128
MAX_BLOCK_ROWS = 8192  # 8192 x 128 f32 = 4 MiB per buffer (16 MiB double-buffered I/O)
VMEM_LIMIT_BYTES = 32 * 1024 * 1024  # safe on v5e/v6e/v7x, covers 16 MiB of buffers


def _po2_quant_kernel(x_ref, o_ref, *, bits, thresh_bits):
    # Compute in f32 regardless of I/O dtype (v5e VPU has no native bf16).
    # TODO(synk): a fully-packed bf16 bit-field path would halve vreg count
    # for bf16 activations; the integer-domain trimming below already keeps
    # the f32-upcast path at/near HBM-bound.
    x = x_ref[...].astype(jnp.float32)

    xb = pltpu.bitcast(x, jnp.uint32)
    sign_bits = xb & jnp.uint32(0x80000000)
    abs_bits = xb & jnp.uint32(0x7FFFFFFF)

    # ceil(log2(|x|)) via the carry trick: adding an all-ones mantissa field
    # bumps the exponent iff the mantissa is non-zero (|x| not an exact power
    # of two).  Zeros / denormals produce a bogus exponent here but are zeroed
    # by the threshold mask below.
    ceil_log2 = (
        (abs_bits + jnp.uint32(0x007FFFFF)) >> jnp.uint32(23)
    ).astype(jnp.int32) - 127

    lo = -(2 ** (bits - 1)) + 1
    log_q = jnp.clip(ceil_log2, lo, -1)

    # Reconstruct 2**log_q by writing the biased exponent field; OR the sign
    # bit back in (replaces the mul-by-sign of the reference).  Threshold
    # compare and select stay in the integer domain (abs_bits already exists).
    pow2_bits = (log_q + 127).astype(jnp.uint32) << jnp.uint32(23)
    out_bits = jnp.where(
        abs_bits >= jnp.uint32(thresh_bits),
        pow2_bits | sign_bits,
        jnp.uint32(0),
    )
    o_ref[...] = pltpu.bitcast(out_bits, jnp.float32).astype(o_ref.dtype)


def _po2_quant_jnp(x, bits):
    """Plain-jnp fallback used only for the <128-element unaligned tail."""
    xf = x.astype(jnp.float32)
    sign_x = jnp.sign(xf)
    abs_x = jnp.abs(xf)
    mask_x = (abs_x >= 1.0 / 2.0 ** (2 ** bits - 1)).astype(jnp.float32)
    log_x = jnp.clip(jnp.ceil(jnp.log2(abs_x)), -(2 ** (bits - 1)) + 1, -1.0)
    return ((2.0 ** log_x) * mask_x * sign_x).astype(x.dtype)


def power_of_2_quantize(x, bits, *, max_block_rows=MAX_BLOCK_ROWS):
    """Apply PowerOf2Quantization.forward to an arbitrary-shaped float array."""
    orig_shape = x.shape
    orig_dtype = x.dtype
    n = x.size
    flat = x.reshape(-1)

    # Exact bit pattern of the threshold 1 / 2**(2**bits - 1) (handles the
    # denormal / underflow-to-zero cases for large `bits` the same way the
    # float reference does).
    thresh = 1.0 / 2.0 ** (2 ** bits - 1)
    thresh_bits = struct.unpack("<I", struct.pack("<f", thresh))[0]

    n_main = (n // LANES) * LANES
    pieces = []

    if n_main:
        rows = n_main // LANES
        slab = (flat if n_main == n else flat[:n_main]).reshape(rows, LANES)

        # Block sizing: as large as possible (amortize ~0.35us/step), but
        # guarantee >= 2 grid steps when rows > 8 so v7x's two TensorCores
        # both get work via the "parallel" dimension semantics.
        if rows <= 8:
            block_rows = rows  # equals full dim -> (8,128) rule satisfied
        else:
            half = -(-rows // 2)                      # cdiv(rows, 2)
            block_rows = min(max_block_rows, ((half + 7) // 8) * 8)
        grid = (pl.cdiv(rows, block_rows),)

        itemsize = jnp.dtype(orig_dtype).itemsize
        out_main = pl.pallas_call(
            functools.partial(_po2_quant_kernel, bits=bits, thresh_bits=thresh_bits),
            out_shape=jax.ShapeDtypeStruct((rows, LANES), orig_dtype),
            grid=grid,
            in_specs=[pl.BlockSpec((block_rows, LANES), lambda i: (i, 0))],
            out_specs=pl.BlockSpec((block_rows, LANES), lambda i: (i, 0)),
            compiler_params=pltpu.CompilerParams(
                dimension_semantics=("parallel",),
                vmem_limit_bytes=VMEM_LIMIT_BYTES,
            ),
            cost_estimate=pl.CostEstimate(
                flops=10 * n_main,
                transcendentals=0,
                bytes_accessed=2 * n_main * itemsize,
            ),
        )(slab)
        pieces.append(out_main.reshape(-1))

    if n_main != n:
        # <128-element ragged tail: negligible work, handled outside the kernel.
        pieces.append(_po2_quant_jnp(flat[n_main:], bits).astype(orig_dtype))

    out = pieces[0] if len(pieces) == 1 else jnp.concatenate(pieces)
    return out.reshape(orig_shape)


def _reference(x, bits):
    """Pure-JAX reference mirroring the PyTorch forward exactly."""
    sign_x = jnp.sign(x)
    abs_x = jnp.abs(x)
    mask_x = (abs_x >= 1.0 / 2.0 ** (2 ** bits - 1)).astype(x.dtype)
    log_x = jnp.ceil(jnp.log2(abs_x))
    log_x = jnp.clip(log_x, -(2 ** (bits - 1)) + 1, -1.0)
    return (2.0 ** log_x) * mask_x * sign_x


if __name__ == "__main__":
    bits = 4  # PowerOf2Quantization(bits=4)
    key = jax.random.PRNGKey(0)

    # NCHW activation-like input (lane-aligned path), small values so the
    # quantization is non-trivial; include exact zeros for the sign/mask path.
    x = jax.random.normal(key, (2, 4, 16, 16), dtype=jnp.float32) * 0.3
    x = x.at[0, 0, 0, :4].set(0.0)

    y = jax.block_until_ready(power_of_2_quantize(x, bits))
    y_ref = _reference(x, bits)
    assert y.shape == x.shape and y.dtype == x.dtype
    assert jnp.allclose(y, y_ref, atol=1e-6), "mismatch vs reference (aligned)"

    # Small non-128-aligned input to exercise the prefix-kernel + jnp-tail path.
    x2 = jax.random.normal(jax.random.PRNGKey(1), (200,), dtype=jnp.float32) * 0.3
    y2 = jax.block_until_ready(power_of_2_quantize(x2, bits))
    y2_ref = _reference(x2, bits)
    assert y2.shape == x2.shape and y2.dtype == x2.dtype
    assert jnp.allclose(y2, y2_ref, atol=1e-6), "mismatch vs reference (unaligned)"

    print("KERNEL_OK")
</pallas_src>

<mosaic_0001>
module attributes {stable_mosaic.version = 11 : i64} {
  func.func @_po2_quant_kernel(%arg0: i32, %arg1: memref<8x128xf32, #tpu.memory_space<vmem>>, %arg2: memref<8x128xf32, #tpu.memory_space<vmem>>) attributes {dimension_semantics = [#tpu.dimension_semantics<parallel>], iteration_bounds = array<i64: 2>, scalar_prefetch = 0 : i64, scratch_operands = 0 : i64, tpu.core_type = #tpu.core_type<tc>, window_params = [{transform_indices = @transform_0, window_bounds = array<i64: 8, 128>}, {transform_indices = @transform_1, window_bounds = array<i64: 8, 128>}]} {
    %c0 = arith.constant 0 : index
    %c0_0 = arith.constant 0 : index
    %0 = vector.load %arg1[%c0, %c0_0] : memref<8x128xf32, #tpu.memory_space<vmem>>, vector<8x128xf32>
    %1 = tpu.bitcast %0 : vector<8x128xf32> -> vector<8x128xi32>
    %c-2147483648_i32 = arith.constant -2147483648 : i32
    %2 = vector.broadcast %c-2147483648_i32 : i32 to vector<8x128xi32>
    %3 = arith.andi %1, %2 : vector<8x128xi32>
    %c2147483647_i32 = arith.constant 2147483647 : i32
    %4 = vector.broadcast %c2147483647_i32 : i32 to vector<8x128xi32>
    %5 = arith.andi %1, %4 : vector<8x128xi32>
    %c8388607_i32 = arith.constant 8388607 : i32
    %6 = vector.broadcast %c8388607_i32 : i32 to vector<8x128xi32>
    %7 = arith.addi %5, %6 : vector<8x128xi32>
    %c23_i32 = arith.constant 23 : i32
    %8 = vector.broadcast %c23_i32 : i32 to vector<8x128xi32>
    %9 = arith.shrui %7, %8 : vector<8x128xi32>
    %c127_i32 = arith.constant 127 : i32
    %10 = vector.broadcast %c127_i32 : i32 to vector<8x128xi32>
    %11 = arith.subi %9, %10 : vector<8x128xi32>
    %c-7_i32 = arith.constant -7 : i32
    %c-1_i32 = arith.constant -1 : i32
    %12 = vector.broadcast %c-7_i32 : i32 to vector<8x128xi32>
    %13 = arith.maxsi %12, %11 : vector<8x128xi32>
    %14 = vector.broadcast %c-1_i32 : i32 to vector<8x128xi32>
    %15 = arith.minsi %14, %13 : vector<8x128xi32>
    %c127_i32_1 = arith.constant 127 : i32
    %16 = vector.broadcast %c127_i32_1 : i32 to vector<8x128xi32>
    %17 = arith.addi %15, %16 : vector<8x128xi32>
    %c23_i32_2 = arith.constant 23 : i32
    %18 = vector.broadcast %c23_i32_2 : i32 to vector<8x128xi32>
    %19 = arith.shli %17, %18 : vector<8x128xi32>
    %c939524096_i32 = arith.constant 939524096 : i32
    %20 = vector.broadcast %c939524096_i32 : i32 to vector<8x128xi32>
    %21 = arith.cmpi uge, %5, %20 : vector<8x128xi32>
    %22 = arith.ori %19, %3 : vector<8x128xi32>
    %c0_i32 = arith.constant 0 : i32
    %23 = vector.broadcast %c0_i32 : i32 to vector<8x128xi32>
    %24 = arith.select %21, %22, %23 : vector<8x128xi1>, vector<8x128xi32>
    %25 = tpu.bitcast %24 : vector<8x128xi32> -> vector<8x128xf32>
    %c0_3 = arith.constant 0 : index
    %c0_4 = arith.constant 0 : index
    %26 = vector.load %arg2[%c0_3, %c0_4] : memref<8x128xf32, #tpu.memory_space<vmem>>, vector<8x128xf32>
    tpu.vector_store %arg2[%c0_3, %c0_4], %25 {strides = array<i32>} : memref<8x128xf32, #tpu.memory_space<vmem>>, vector<8x128xf32>,
    return
  }
  func.func @transform_0(%arg0: i32) -> (i32, i32) {
    %c0_i32 = arith.constant 0 : i32
    %c0_i32_0 = arith.constant 0 : i32
    return %arg0, %c0_i32 : i32, i32
  }
  func.func @transform_1(%arg0: i32) -> (i32, i32) {
    %c0_i32 = arith.constant 0 : i32
    %c0_i32_0 = arith.constant 0 : i32
    return %arg0, %c0_i32 : i32, i32
  }
}

</mosaic_0001>

<llo_original>
// kernel: tpu_custom_call.1
$region0: #{tpu_custom_call.1}
  #allocation0 [shape = 'u32[]', space=smem, size = 0x4, offset = 0x4, fixed_abs, tag = 'smem constant byte address 0x4 - core index']
  #allocation1 [shape = 'u32[72,128]{1,0:T(1,128)}', space=vmem, size = 0x9000, scoped, tag = 'internal scratch']
  %s0 = inlined_call_operand.hbm [shape: f32[16,128], index: 0, kind: input, shape index: {}]
  %s1 = inlined_call_operand.hbm [shape: f32[16,128], index: 1, kind: output, shape index: {}]
  %s2 = sld [smem:[#allocation0]]
  $region41: #{tpu_custom_call.1} parent=0
    _
  %s4 = ssub.s32 1, %s2
  %s5 = scalar_select 0, %s4, %s2
  $region1: #{tpu_custom_call.1} parent=0
    #allocation2 [shape = 'u8[8192]{0}', space=vmem, size = 0x2000, scoped, tag = 'input window, operand 0']
    #allocation3 [shape = 's32[2]{0}', space=sflag, size = 0x8, scoped, tag = 'scoped memory for tpu_custom_call.1']
    #allocation4 [shape = 's32[2]{0}', space=sflag, size = 0x8, scoped, tag = 'scoped memory for tpu_custom_call.1']
    #allocation5 [shape = 'u8[8192]{0}', space=vmem, size = 0x2000, scoped, tag = 'output window, operand 0']
    %6 = vsyncpa [#allocation3], 0
    %s7 = scalar_lea.sflag [#allocation3], 1
    %8 = vsyncpa %s7, 0
    %9 = vsyncpa [#allocation4], 0
    %s10 = scalar_lea.sflag [#allocation4], 1
    %11 = vsyncpa %s10, 0
    loop: start=0, step=1, limit=4
    $region2: #{tpu_custom_call.1} parent=1 // loop_pre_header
      _
    $region3: #{tpu_custom_call.1} parent=1 // loop_header
      %s13 = sphi 0, %s17
      %p14 = scmp.ge.s32.totalorder %s13, 4
      %s23 = sphi 0, %s25
      %s26 = sphi 0, %s23
      %s27 = sphi 0, %s26
      %s43 = sphi 0, %s27
      %s49 = sphi 0, %s51
      %s52 = sphi 0, %s49
      %s53 = sphi 0, %s52
      %s69 = sphi 0, %s53
    $region4: #{tpu_custom_call.1} parent=1 // loop_header_branch
      %16 = sbr.rel (%p14) target = $region8
    $region5: #{tpu_custom_call.1} parent=1 // loop_body
      %s18 = ssub.s32 %s13, 1
      %s19 = ssub.s32 %s13, 2
      %s20 = sadd.s32 %s13, 1
      %s21 = ssub.s32 %s13, %s20
      %p22 = scmp.eq.s32.totalorder %s21, 0
      %s24 = sadd.s32 %s23, 1
      %s25 = scalar_select %p22, %s23, %s24
      %p28 = pneg %p22
      %p29 = scmp.eq.s32.totalorder %s13, 1
      %p30 = por %p28, %p29
      %p31 = scmp.ne.s32.totalorder %s23, %s26
      %p32 = scmp.eq.s32.totalorder %s13, 0
      %p33 = por %p31, %p32
      %p34 = scmp.ne.s32.totalorder %s23, %s26
      %p35 = scmp.eq.s32.totalorder %s18, 1
      %p36 = por %p34, %p35
      %p37 = scmp.ne.s32.totalorder %s26, %s27
      %p38 = scmp.eq.s32.totalorder %s18, 0
      %p39 = por %p37, %p38
      %p40 = scmp.ne.s32.totalorder %s26, %s27
      %p41 = scmp.eq.s32.totalorder %s19, 1
      %p42 = por %p40, %p41
      %p44 = scmp.ne.s32.totalorder %s27, %s43
      %p45 = scmp.eq.s32.totalorder %s19, 0
      %p46 = por %p44, %p45
      %s47 = ssub.s32 %s13, %s20
      %p48 = scmp.eq.s32.totalorder %s47, 0
      %s50 = sadd.s32 %s49, 1
      %s51 = scalar_select %p48, %s49, %s50
      %p54 = pneg %p48
      %p55 = scmp.eq.s32.totalorder %s13, 1
      %p56 = por %p54, %p55
      %p57 = scmp.ne.s32.totalorder %s49, %s52
      %p58 = scmp.eq.s32.totalorder %s13, 0
      %p59 = por %p57, %p58
      %p60 = scmp.ne.s32.totalorder %s49, %s52
      %p61 = scmp.eq.s32.totalorder %s18, 1
      %p62 = por %p60, %p61
      %p63 = scmp.ne.s32.totalorder %s52, %s53
      %p64 = scmp.eq.s32.totalorder %s18, 0
      %p65 = por %p63, %p64
      %p66 = scmp.ne.s32.totalorder %s52, %s53
      %p67 = scmp.eq.s32.totalorder %s19, 1
      %p68 = por %p66, %p67
      %p70 = scmp.ne.s32.totalorder %s53, %s69
      %p71 = scmp.eq.s32.totalorder %s19, 0
      %p72 = por %p70, %p71
      %p73 = scmp.le.s32.totalorder 1, %s13
      %p74 = scmp.lt.s32.totalorder %s13, 3
      %p75 = pnand %p73, %p74
      %p76 = pneg %p75
      // Predicated region
      $region9: #{tpu_custom_call.1} parent=5 // pred_check
        _
      $region10: #{tpu_custom_call.1} parent=5 // pred_check_branch
        %78 = sbr.rel (%p75) target = $region12
      $region11: #{tpu_custom_call.1} parent=5 // pred_region
        %s79 = ssub.s32 %s13, 1
      $region12: #{tpu_custom_call.1} parent=5 // pred_fallthru
        _
      %p80 = scmp.lt.s32.totalorder %s13, 2
      // Predicated region
      $region13: #{tpu_custom_call.1} parent=5 // pred_check
        %p81 = pneg %p80
      $region14: #{tpu_custom_call.1} parent=5 // pred_check_branch
        %83 = sbr.rel (%p81) target = $region16
      $region15: #{tpu_custom_call.1} parent=5 // pred_region
        // Predicated region
        $region17: #{tpu_custom_call.1} parent=15 // pred_check
          %p84 = pneg %p33
        $region18: #{tpu_custom_call.1} parent=15 // pred_check_branch
          %86 = sbr.rel (%p84) target = $region20
        $region19: #{tpu_custom_call.1} parent=15 // pred_region
          %s87 = sand.u32 %s23, 1
          %s88 = scalar_lea.sflag [#allocation3], %s87
          %s89 = sand.u32 %s23, 1
          %s90 = smul.addr %s89, 8
          %s91 = scalar_lea.vmem [#allocation2], %s90
          %93 = vsyncadd %s88, 0
          %s94 = smul.addr %s13, 8
          %s95 = scalar_lea.hbm %s0, %s94
          %s97 = sshll.u32 %s95, 4
          %s98 = int_to_ptr.hbm [resolvable:$true] %s97
          %s99 = sshll.u32 %s91, 4
          %s100 = int_to_ptr.vmem [resolvable:$true] %s99
          %102 = dma.hbm_to_vmem [thread:$0]  %s98, 128, %s100, %s88
        $region20: #{tpu_custom_call.1} parent=15 // pred_fallthru
          _
      $region16: #{tpu_custom_call.1} parent=5 // pred_fallthru
        _
      %p103 = scmp.le.s32.totalorder 1, %s13
      %p104 = scmp.lt.s32.totalorder %s13, 3
      %p105 = pnand %p103, %p104
      %p106 = pneg %p105
      // Predicated region
      $region21: #{tpu_custom_call.1} parent=5 // pred_check
        _
      $region22: #{tpu_custom_call.1} parent=5 // pred_check_branch
        %108 = sbr.rel (%p105) target = $region24
      $region23: #{tpu_custom_call.1} parent=5 // pred_region
        %s109 = ssub.s32 %s13, 1
        %s110 = sand.u32 %s26, 1
        %s111 = scalar_lea.sflag [#allocation3], %s110
        %s112 = sand.u32 %s26, 1
        %s113 = smul.addr %s112, 8
        %s114 = scalar_lea.vmem [#allocation2], %s113
        // Predicated region
        $region25: #{tpu_custom_call.1} parent=23 // pred_check
          %p115 = pneg %p39
        $region26: #{tpu_custom_call.1} parent=23 // pred_check_branch
          %117 = sbr.rel (%p115) target = $region28
        $region27: #{tpu_custom_call.1} parent=23 // pred_region
          %119 = dma.done %s111, 128
        $region28: #{tpu_custom_call.1} parent=23 // pred_fallthru
          _
        %s120 = sand.u32 %s26, 1
        %s121 = scalar_lea.sflag [#allocation3], %s120
        %s122 = sand.u32 %s26, 1
        %s123 = smul.addr %s122, 8
        %s124 = scalar_lea.vmem [#allocation2], %s123
        %p125 = pneg %p39
        %p126 = pneg %p36
        %p127 = pneg %p65
        %p128 = pneg %p62
        %s129 = sand.u32 %s52, 1
        %s130 = scalar_lea.sflag [#allocation4], %s129
        %s131 = sand.u32 %s52, 1
        %s132 = smul.addr %s131, 8
        %s133 = scalar_lea.vmem [#allocation5], %s132
        %v134 = vld [vmem:[%s114] sm:$0xff]
        %v136 = vand.u32 %v134, 2147483648
        %v137 = vand.u32 %v134, 2147483647
        %v138 = vadd.s32 %v137, 8388607
        %v139 = vshrl.u32 %v138, 23
        %v140 = vsub.s32 %v139, 127
        %vm141 = vcmp.gt.s32.totalorder %v140, 4294967289
        %v142 = vsel %vm141, %v140, 4294967289
        %vm143 = vcmp.lt.s32.totalorder %v142, 4294967295
        %v144 = vsel %vm143, %v142, 4294967295
        %v145 = vadd.s32 %v144, 127
        %v146 = vshll.u32 %v145, 23
        %v147 = vadd.s32 %v137, 2147483648
        %vm149 = vcmp.ge.s32.totalorder %v147, 3087007744
        %v150 = vor.u32 %v146, %v136
        %v151 = vsel %vm149, %v150, 0
        %153 = vst [vmem:[%s133] sm:$0xff] %v151
        %s154 = sand.u32 %s52, 1
        %s155 = scalar_lea.sflag [#allocation4], %s154
        %s156 = sand.u32 %s52, 1
        %s157 = smul.addr %s156, 8
        %s158 = scalar_lea.vmem [#allocation5], %s157
        // Predicated region
        $region29: #{tpu_custom_call.1} parent=23 // pred_check
          %p159 = pneg %p62
        $region30: #{tpu_custom_call.1} parent=23 // pred_check_branch
          %161 = sbr.rel (%p159) target = $region32
        $region31: #{tpu_custom_call.1} parent=23 // pred_region
          %163 = vsyncadd %s155, 0
          %s164 = smul.addr %s18, 8
          %s165 = scalar_lea.hbm %s1, %s164
          %s167 = sshll.u32 %s158, 4
          %s168 = int_to_ptr.vmem [resolvable:$true] %s167
          %s169 = sshll.u32 %s165, 4
          %s170 = int_to_ptr.hbm [resolvable:$true] %s169
          %172 = dma.vmem_to_hbm [thread:$0]  %s168, 128, %s170, %s155
        $region32: #{tpu_custom_call.1} parent=23 // pred_fallthru
          _
      $region24: #{tpu_custom_call.1} parent=5 // pred_fallthru
        _
      %p173 = scmp.le.s32.totalorder 2, %s13
      // Predicated region
      $region33: #{tpu_custom_call.1} parent=5 // pred_check
        %p174 = pneg %p173
      $region34: #{tpu_custom_call.1} parent=5 // pred_check_branch
        %176 = sbr.rel (%p174) target = $region36
      $region35: #{tpu_custom_call.1} parent=5 // pred_region
        %s177 = ssub.s32 %s13, 2
        // Predicated region
        $region37: #{tpu_custom_call.1} parent=35 // pred_check
          %p178 = pneg %p68
        $region38: #{tpu_custom_call.1} parent=35 // pred_check_branch
          %180 = sbr.rel (%p178) target = $region40
        $region39: #{tpu_custom_call.1} parent=35 // pred_region
          %s181 = sand.u32 %s53, 1
          %s182 = scalar_lea.sflag [#allocation4], %s181
          %s183 = sand.u32 %s53, 1
          %s184 = smul.addr %s183, 8
          %s185 = scalar_lea.vmem [#allocation5], %s184
          %187 = dma.done %s182, 128
        $region40: #{tpu_custom_call.1} parent=35 // pred_fallthru
          _
      $region36: #{tpu_custom_call.1} parent=5 // pred_fallthru
        _
    $region6: #{tpu_custom_call.1} parent=1 // loop_footer
      %s17 = sadd.s32 1, %s13
    $region7: #{tpu_custom_call.1} parent=1 // loop_footer_branch
      %12 = sbr.rel target = $region3
    $region8: #{tpu_custom_call.1} parent=1 // loop_exit
      _
    %188 = vsyncpa [#allocation3], 1
    %s189 = scalar_lea.sflag [#allocation3], 1
    %190 = vsyncpa %s189, 1
    %191 = vsyncpa [#allocation4], 1
    %s192 = scalar_lea.sflag [#allocation4], 1
    %193 = vsyncpa %s192, 1

</llo_original>
